<compile_context>
chip_gen: v5e
topology: v5e:2x2
jax: 0.10.0
libtpu: 0.0.40
codegen_flags: <defaults>
</compile_context>

<pallas_src>
import numpy as np

import jax
import jax.numpy as jnp
from jax.experimental import pallas as pl
from jax.experimental.pallas import tpu as pltpu


# ----------------------------------------------------------------------------
# Parameter construction (mirrors the PyTorch module exactly; pure NumPy).
# ----------------------------------------------------------------------------
def _make_rgb_matrix(w: float, w_ceil: int, autotune: bool = True, idx=None) -> np.ndarray:
    """(3, w_ceil) RGB extraction weights of RGBExtractor_fixed."""
    rgb = np.zeros((3, w_ceil), dtype=np.float32)
    if not autotune:
        rgb[0, int(np.round(w / 4))] = 1.0
        rgb[1, int(np.round(w / 2))] = 1.0
        rgb[2, int(np.round(3 * w / 4))] = 1.0
        return rgb
    # RGBExtractor_fixed.autotune: the profile-based indices are immediately
    # overwritten by the fixed 5/19, 9/19, 14/19 fractions (or user idx), so
    # the profile computation has no effect on the output and is skipped.
    idx_red = 5.0 * w / 19.0
    idx_green = 9.0 * w / 19.0
    idx_blue = 14.0 * w / 19.0
    if idx is not None:
        idx_red, idx_green, idx_blue = float(idx[0]), float(idx[1]), float(idx[2])
    for c, v in enumerate((idx_red, idx_green, idx_blue)):
        if np.ceil(v) == v:
            rgb[c, int(np.round(v))] = 1.0
        else:
            rgb[c, int(np.floor(v))] = np.ceil(v) - v
            rgb[c, int(np.floor(v)) + 1] = v - np.floor(v)
    return rgb


# ----------------------------------------------------------------------------
# Pallas kernel
# ----------------------------------------------------------------------------
def _make_kernel(W: int, w_ceil: int, taps):
    """taps: tuple (per channel) of tuples of (tap_index, weight) Python consts.

    W here is the (possibly padded) lane width of the blocks.
    """

    def kernel(x_ref, z_ref, y_ref, rf_ref):
        xv = x_ref[0, 0, :, :].astype(jnp.float32)   # (th, W) native dtype -> f32
        zv = z_ref[0, 0, :, :].astype(jnp.float32)
        th = xv.shape[0]
        lane = jax.lax.broadcasted_iota(jnp.int32, (th, W), 1)

        # Hoisted masks: one int32 compare per *distinct* shift amount, reused
        # across the four boxcars and all tap shifts.
        mask_ge = {}
        mask_lt = {}

        def _mask_ge(j):
            if j not in mask_ge:
                mask_ge[j] = lane >= j
            return mask_ge[j]

        def _mask_lt(j):
            if j not in mask_lt:
                mask_lt[j] = lane < (W - j)
            return mask_lt[j]

        def shift_right(v, j):                       # out[w] = v[w - j], 0 for w < j
            if j <= 0:
                return v
            if j >= W:
                return jnp.zeros_like(v)
            r = pltpu.roll(v, shift=j, axis=1)
            return jnp.where(_mask_ge(j), r, 0.0)

        def shift_left(v, j):                        # out[w] = v[w + j], 0 for w >= W-j
            if j <= 0:
                return v
            if j >= W:
                return jnp.zeros_like(v)
            r = pltpu.roll(v, shift=W - j, axis=1)   # roll by -j (mod W)
            return jnp.where(_mask_lt(j), r, 0.0)

        def causal_boxcar(v):                        # sum_{d=0}^{w_ceil-1} v[w - d]
            # log2(w_ceil) doubling decomposition; zero-fill shifts make the
            # left boundary exact (matches the zero-padded torch conv).
            res = None
            win, size, off, rem = v, 1, 0, w_ceil
            while rem:
                if rem & 1:
                    part = shift_right(win, off)
                    res = part if res is None else res + part
                    off += size
                rem >>= 1
                if rem:
                    win = win + shift_right(win, size)
                    size *= 2
            return res

        z_norm = causal_boxcar(zv)
        # EUP approx reciprocal + one Newton-Raphson step (~2^-24 rel. error),
        # shared across the 3 channels.
        r0 = pl.reciprocal(z_norm, approx=True)
        inv_z = r0 * (2.0 - z_norm * r0)

        for c in range(3):
            ch = taps[c]
            if ch:
                xr = None
                rf = None
                for (i, wgt) in ch:
                    xt = shift_left(xv, i) * wgt
                    zt = shift_right(zv, i) * wgt
                    xr = xt if xr is None else xr + xt
                    rf = zt if rf is None else rf + zt
            else:
                xr = jnp.zeros_like(xv)
                rf = jnp.zeros_like(zv)
            y_un = causal_boxcar(zv * xr)            # spreader boxcar of x_RGB
            y_ref[0, c, :, :] = (y_un * inv_z).astype(y_ref.dtype)
            rf_ref[0, c, :, :] = rf.astype(rf_ref.dtype)

    return kernel


# ----------------------------------------------------------------------------
# Tiling / VMEM planning
# ----------------------------------------------------------------------------
def _vmem_plan():
    """(block_budget_bytes, vmem_limit_bytes) per TPU generation."""
    try:
        info = pltpu.get_tpu_info()
        cap = int(getattr(info, "vmem_capacity_bytes", 64 * 1024 * 1024))
    except Exception:
        cap = 64 * 1024 * 1024
    if cap >= 96 * 1024 * 1024:
        # v5e / v6e: 128 MiB physical VMEM -> large blocks, raised scoped limit.
        return 20 * 1024 * 1024, 64 * 1024 * 1024
    # v7x: 64 MiB per TC.  Budget counts the double-buffered in/out blocks;
    # the ~10-12 live (th, W) f32 boxcar temporaries still fit under the limit.
    return 8 * 1024 * 1024, 40 * 1024 * 1024


def _pick_row_tile(N: int, H: int, W: int, block_budget_bytes: int,
                   per_elem_block_bytes: int) -> int:
    """Row tile: largest multiple of 8 under the VMEM budget, then shrunk so the
    grid has enough steps (>= 8 when possible) for pipelining / megacore."""
    if H <= 8:
        return H                                       # full extent, always legal
    budget_rows = max(8, block_budget_bytes // (per_elem_block_bytes * max(W, 1)))
    th = min(budget_rows, H)
    th = max(8, (th // 8) * 8)

    def n_steps(t):
        return N * ((H + t - 1) // t)

    while th > 8 and n_steps(th) < 8:
        nt = max(8, ((th // 2 + 7) // 8) * 8)
        if nt >= th:
            nt = th - 8
        th = max(8, nt)
    return th


# ----------------------------------------------------------------------------
# Module-equivalent wrapper
# ----------------------------------------------------------------------------
def color_restoration_forward(x, z, w: float, idx=None, *, autotune: bool = True,
                              out_dtype=jnp.float32):
    """Pallas-TPU forward of ColorRestoration(w, learnable=False, autotune=autotune).

    x, z: (N, 1, H, W). Returns {'y': (N,3,H,W), 'rgb_filter_image': (N,3,H,W)}.
    out_dtype: f32 by default (parity with torch); bf16 halves the write traffic.
    """
    # TODO(synk): the learnable=True branch (RGBExtractor with softmax-smoothed
    # learnable taps) is not implemented; only the default fixed/autotune path.
    N, C, H, W = x.shape
    if C != 1 or z.shape != (N, 1, H, W):
        raise NotImplementedError("ColorRestoration expects x, z of shape (N, 1, H, W)")
    w_ceil = int(np.ceil(w))
    rgb = _make_rgb_matrix(float(w), w_ceil, autotune=autotune, idx=idx)
    taps = tuple(
        tuple((int(i), float(rgb[c, i])) for i in range(w_ceil) if rgb[c, i] != 0.0)
        for c in range(3)
    )

    # Lane-dense stores: pad W up to a multiple of 128 only if needed.
    W_pad = ((W + 127) // 128) * 128
    if W_pad != W:
        pad = ((0, 0), (0, 0), (0, 0), (0, W_pad - W))
        x_in = jnp.pad(x, pad)
        z_in = jnp.pad(z, pad)
    else:
        x_in, z_in = x, z

    in_sz = jnp.dtype(x_in.dtype).itemsize
    out_sz = jnp.dtype(out_dtype).itemsize
    # Double-buffered blocks per grid step: 2 input slabs + 2x3 output slabs.
    per_elem_block_bytes = 2 * (2 * in_sz) + 2 * (6 * out_sz)

    block_budget, vmem_limit = _vmem_plan()
    th = _pick_row_tile(N, H, W_pad, block_budget, per_elem_block_bytes)
    grid = (N, pl.cdiv(H, th))
    kernel = _make_kernel(W_pad, w_ceil, taps)

    flops = 2 * N * 3 * H * W_pad * (w_ceil + 4)
    bytes_accessed = N * H * W_pad * (2 * in_sz + 6 * out_sz)

    y, rf = pl.pallas_call(
        kernel,
        out_shape=(
            jax.ShapeDtypeStruct((N, 3, H, W_pad), out_dtype),
            jax.ShapeDtypeStruct((N, 3, H, W_pad), out_dtype),
        ),
        grid_spec=pltpu.PrefetchScalarGridSpec(
            num_scalar_prefetch=0,
            grid=grid,
            in_specs=[
                pl.BlockSpec((1, 1, th, W_pad), lambda n, hb: (n, 0, hb, 0)),
                pl.BlockSpec((1, 1, th, W_pad), lambda n, hb: (n, 0, hb, 0)),
            ],
            out_specs=(
                pl.BlockSpec((1, 3, th, W_pad), lambda n, hb: (n, 0, hb, 0)),
                pl.BlockSpec((1, 3, th, W_pad), lambda n, hb: (n, 0, hb, 0)),
            ),
        ),
        compiler_params=pltpu.CompilerParams(
            dimension_semantics=("parallel", "parallel"),
            vmem_limit_bytes=vmem_limit,
        ),
        cost_estimate=pl.CostEstimate(
            flops=flops, transcendentals=N * H * W_pad, bytes_accessed=bytes_accessed
        ),
    )(x_in, z_in)

    if W_pad != W:
        y = y[..., :W]
        rf = rf[..., :W]
    return {"y": y, "rgb_filter_image": rf}


# ----------------------------------------------------------------------------
# Plain-JAX reference (mirrors every torch op) for verification
# ----------------------------------------------------------------------------
def _conv_nchw(x, w_oihw, pad_w):
    return jax.lax.conv_general_dilated(
        x, w_oihw, window_strides=(1, 1),
        padding=((0, 0), (pad_w, pad_w)),
        dimension_numbers=("NCHW", "OIHW", "NCHW"),
        precision=jax.lax.Precision.HIGHEST,
    )


def _reference(x, z, w: float, idx=None, autotune: bool = True):
    w_ceil = int(np.ceil(w))
    N, _, H, W = x.shape
    x = x.astype(jnp.float32)
    z = z.astype(jnp.float32)

    # Space2Features
    eye_f = np.ascontiguousarray(
        np.flip(np.eye(w_ceil, dtype=np.float32), axis=1)[:, None, None, :])
    z_exp = _conv_nchw(z, jnp.asarray(eye_f), w_ceil - 1)[..., :W]
    x_exp = x * z_exp
    delay = np.zeros((w_ceil, w_ceil, 1, w_ceil), dtype=np.float32)
    for i in range(w_ceil):
        delay[i, i, 0, i] = 1.0
    x_exp = _conv_nchw(x_exp, jnp.asarray(delay), w_ceil - 1)[..., w_ceil - 1:]

    # RGBExtractor_fixed (+ autotune)
    rgb = _make_rgb_matrix(float(w), w_ceil, autotune=autotune, idx=idx)
    x_rgb = _conv_nchw(x_exp, jnp.asarray(rgb[:, :, None, None]), 0)
    rgb_flip = np.ascontiguousarray(rgb[:, None, None, ::-1])
    rgb_filter_image = _conv_nchw(z, jnp.asarray(rgb_flip), w_ceil - 1)[..., :W]

    # LenticuleSpreader
    spread3 = np.zeros((3, 3, 1, w_ceil), dtype=np.float32)
    for c in range(3):
        spread3[c, c, 0, :] = 1.0
    y_unorm = _conv_nchw(x_rgb, jnp.asarray(spread3), w_ceil - 1)[..., :W]
    spread1 = np.ones((1, 1, 1, w_ceil), dtype=np.float32)
    z_norm = _conv_nchw(z, jnp.asarray(spread1), w_ceil - 1)[..., :W]
    y = y_unorm / z_norm
    return y, rgb_filter_image


if __name__ == "__main__":
    key = jax.random.PRNGKey(0)
    k1, k2, k3, k4 = jax.random.split(key, 4)

    # Case 1: w = 8.0 (w_ceil = 8), N=2, H=16, W=128 (lane-aligned width).
    N, H, W = 2, 16, 128
    w = 8.0
    x = jax.random.normal(k1, (N, 1, H, W), dtype=jnp.float32)
    z = jax.random.uniform(k2, (N, 1, H, W), dtype=jnp.float32, minval=0.5, maxval=1.5)
    out = color_restoration_forward(x, z, w)
    y = jax.block_until_ready(out["y"])
    rf = jax.block_until_ready(out["rgb_filter_image"])
    y_ref, rf_ref = _reference(x, z, w)
    assert y.shape == (N, 3, H, W) and rf.shape == (N, 3, H, W)
    assert jnp.allclose(y, y_ref, atol=1e-4, rtol=1e-4), float(jnp.max(jnp.abs(y - y_ref)))
    assert jnp.allclose(rf, rf_ref, atol=1e-5, rtol=1e-5)

    # Case 2: non-power-of-two w_ceil (boxcar decomposition), ragged row blocks
    # are exercised when H is not a multiple of the chosen tile on larger inputs.
    N2, H2, W2 = 1, 8, 256
    w2 = 10.5  # w_ceil = 11
    x2 = jax.random.normal(k3, (N2, 1, H2, W2), dtype=jnp.float32)
    z2 = jax.random.uniform(k4, (N2, 1, H2, W2), dtype=jnp.float32, minval=0.5, maxval=1.5)
    out2 = color_restoration_forward(x2, z2, w2)
    y2 = jax.block_until_ready(out2["y"])
    rf2 = jax.block_until_ready(out2["rgb_filter_image"])
    y2_ref, rf2_ref = _reference(x2, z2, w2)
    assert jnp.allclose(y2, y2_ref, atol=1e-4, rtol=1e-4), float(jnp.max(jnp.abs(y2 - y2_ref)))
    assert jnp.allclose(rf2, rf2_ref, atol=1e-5, rtol=1e-5)

    print("KERNEL_OK")
</pallas_src>

<mosaic_0001>
module attributes {stable_mosaic.version = 11 : i64} {
  func.func @kernel(%arg0: i32, %arg1: i32, %arg2: memref<1x1x8x128xf32, #tpu.memory_space<vmem>>, %arg3: memref<1x1x8x128xf32, #tpu.memory_space<vmem>>, %arg4: memref<1x3x8x128xf32, #tpu.memory_space<vmem>>, %arg5: memref<1x3x8x128xf32, #tpu.memory_space<vmem>>) attributes {dimension_semantics = [#tpu.dimension_semantics<parallel>, #tpu.dimension_semantics<parallel>], iteration_bounds = array<i64: 2, 2>, scalar_prefetch = 0 : i64, scratch_operands = 0 : i64, tpu.core_type = #tpu.core_type<tc>, window_params = [{transform_indices = @transform_0, window_bounds = array<i64: 1, 1, 8, 128>}, {transform_indices = @transform_1, window_bounds = array<i64: 1, 1, 8, 128>}, {transform_indices = @transform_2, window_bounds = array<i64: 1, 3, 8, 128>}, {transform_indices = @transform_3, window_bounds = array<i64: 1, 3, 8, 128>}]} {
    %c0 = arith.constant 0 : index
    %c0_0 = arith.constant 0 : index
    %c0_1 = arith.constant 0 : index
    %c0_2 = arith.constant 0 : index
    %0 = vector.load %arg2[%c0, %c0_0, %c0_1, %c0_2] : memref<1x1x8x128xf32, #tpu.memory_space<vmem>>, vector<1x1x8x128xf32>
    %1 = vector.shape_cast %0 : vector<1x1x8x128xf32> to vector<8x128xf32>
    %c0_3 = arith.constant 0 : index
    %c0_4 = arith.constant 0 : index
    %c0_5 = arith.constant 0 : index
    %c0_6 = arith.constant 0 : index
    %2 = vector.load %arg3[%c0_3, %c0_4, %c0_5, %c0_6] : memref<1x1x8x128xf32, #tpu.memory_space<vmem>>, vector<1x1x8x128xf32>
    %3 = vector.shape_cast %2 : vector<1x1x8x128xf32> to vector<8x128xf32>
    %4 = tpu.iota {dimensions = array<i32: 1>} : vector<8x128xi32>
    %c1_i32 = arith.constant 1 : i32
    %5 = tpu.dynamic_rotate %3 by %c1_i32 dim 1 : vector<8x128xf32>, i32 -> vector<8x128xf32>
    %c1_i32_7 = arith.constant 1 : i32
    %6 = vector.broadcast %c1_i32_7 : i32 to vector<8x128xi32>
    %7 = arith.cmpi sge, %4, %6 : vector<8x128xi32>
    %cst = arith.constant 0.000000e+00 : f32
    %8 = vector.broadcast %cst : f32 to vector<8x128xf32>
    %9 = arith.select %7, %5, %8 : vector<8x128xi1>, vector<8x128xf32>
    %10 = arith.addf %3, %9 : vector<8x128xf32>
    %c2_i32 = arith.constant 2 : i32
    %11 = tpu.dynamic_rotate %10 by %c2_i32 dim 1 : vector<8x128xf32>, i32 -> vector<8x128xf32>
    %c2_i32_8 = arith.constant 2 : i32
    %12 = vector.broadcast %c2_i32_8 : i32 to vector<8x128xi32>
    %13 = arith.cmpi sge, %4, %12 : vector<8x128xi32>
    %cst_9 = arith.constant 0.000000e+00 : f32
    %14 = vector.broadcast %cst_9 : f32 to vector<8x128xf32>
    %15 = arith.select %13, %11, %14 : vector<8x128xi1>, vector<8x128xf32>
    %16 = arith.addf %10, %15 : vector<8x128xf32>
    %c4_i32 = arith.constant 4 : i32
    %17 = tpu.dynamic_rotate %16 by %c4_i32 dim 1 : vector<8x128xf32>, i32 -> vector<8x128xf32>
    %c4_i32_10 = arith.constant 4 : i32
    %18 = vector.broadcast %c4_i32_10 : i32 to vector<8x128xi32>
    %19 = arith.cmpi sge, %4, %18 : vector<8x128xi32>
    %cst_11 = arith.constant 0.000000e+00 : f32
    %20 = vector.broadcast %cst_11 : f32 to vector<8x128xf32>
    %21 = arith.select %19, %17, %20 : vector<8x128xi1>, vector<8x128xf32>
    %22 = arith.addf %16, %21 : vector<8x128xf32>
    %23 = tpu.reciprocal %22 {approx = true} : vector<8x128xf32> -> vector<8x128xf32>
    %24 = arith.mulf %22, %23 : vector<8x128xf32>
    %cst_12 = arith.constant 2.000000e+00 : f32
    %25 = vector.broadcast %cst_12 : f32 to vector<8x128xf32>
    %26 = arith.subf %25, %24 : vector<8x128xf32>
    %27 = arith.mulf %23, %26 : vector<8x128xf32>
    %c126_i32 = arith.constant 126 : i32
    %28 = tpu.dynamic_rotate %1 by %c126_i32 dim 1 : vector<8x128xf32>, i32 -> vector<8x128xf32>
    %c126_i32_13 = arith.constant 126 : i32
    %29 = vector.broadcast %c126_i32_13 : i32 to vector<8x128xi32>
    %30 = arith.cmpi slt, %4, %29 : vector<8x128xi32>
    %cst_14 = arith.constant 0.000000e+00 : f32
    %31 = vector.broadcast %cst_14 : f32 to vector<8x128xf32>
    %32 = arith.select %30, %28, %31 : vector<8x128xi1>, vector<8x128xf32>
    %cst_15 = arith.constant 0.894736826 : f32
    %33 = vector.broadcast %cst_15 : f32 to vector<8x128xf32>
    %34 = arith.mulf %32, %33 : vector<8x128xf32>
    %c2_i32_16 = arith.constant 2 : i32
    %35 = tpu.dynamic_rotate %3 by %c2_i32_16 dim 1 : vector<8x128xf32>, i32 -> vector<8x128xf32>
    %cst_17 = arith.constant 0.000000e+00 : f32
    %36 = vector.broadcast %cst_17 : f32 to vector<8x128xf32>
    %37 = arith.select %13, %35, %36 : vector<8x128xi1>, vector<8x128xf32>
    %cst_18 = arith.constant 0.894736826 : f32
    %38 = vector.broadcast %cst_18 : f32 to vector<8x128xf32>
    %39 = arith.mulf %37, %38 : vector<8x128xf32>
    %c125_i32 = arith.constant 125 : i32
    %40 = tpu.dynamic_rotate %1 by %c125_i32 dim 1 : vector<8x128xf32>, i32 -> vector<8x128xf32>
    %c125_i32_19 = arith.constant 125 : i32
    %41 = vector.broadcast %c125_i32_19 : i32 to vector<8x128xi32>
    %42 = arith.cmpi slt, %4, %41 : vector<8x128xi32>
    %cst_20 = arith.constant 0.000000e+00 : f32
    %43 = vector.broadcast %cst_20 : f32 to vector<8x128xf32>
    %44 = arith.select %42, %40, %43 : vector<8x128xi1>, vector<8x128xf32>
    %cst_21 = arith.constant 0.105263159 : f32
    %45 = vector.broadcast %cst_21 : f32 to vector<8x128xf32>
    %46 = arith.mulf %44, %45 : vector<8x128xf32>
    %c3_i32 = arith.constant 3 : i32
    %47 = tpu.dynamic_rotate %3 by %c3_i32 dim 1 : vector<8x128xf32>, i32 -> vector<8x128xf32>
    %c3_i32_22 = arith.constant 3 : i32
    %48 = vector.broadcast %c3_i32_22 : i32 to vector<8x128xi32>
    %49 = arith.cmpi sge, %4, %48 : vector<8x128xi32>
    %cst_23 = arith.constant 0.000000e+00 : f32
    %50 = vector.broadcast %cst_23 : f32 to vector<8x128xf32>
    %51 = arith.select %49, %47, %50 : vector<8x128xi1>, vector<8x128xf32>
    %cst_24 = arith.constant 0.105263159 : f32
    %52 = vector.broadcast %cst_24 : f32 to vector<8x128xf32>
    %53 = arith.mulf %51, %52 : vector<8x128xf32>
    %54 = arith.addf %34, %46 : vector<8x128xf32>
    %55 = arith.addf %39, %53 : vector<8x128xf32>
    %56 = arith.mulf %3, %54 : vector<8x128xf32>
    %c1_i32_25 = arith.constant 1 : i32
    %57 = tpu.dynamic_rotate %56 by %c1_i32_25 dim 1 : vector<8x128xf32>, i32 -> vector<8x128xf32>
    %cst_26 = arith.constant 0.000000e+00 : f32
    %58 = vector.broadcast %cst_26 : f32 to vector<8x128xf32>
    %59 = arith.select %7, %57, %58 : vector<8x128xi1>, vector<8x128xf32>
    %60 = arith.addf %56, %59 : vector<8x128xf32>
    %c2_i32_27 = arith.constant 2 : i32
    %61 = tpu.dynamic_rotate %60 by %c2_i32_27 dim 1 : vector<8x128xf32>, i32 -> vector<8x128xf32>
    %cst_28 = arith.constant 0.000000e+00 : f32
    %62 = vector.broadcast %cst_28 : f32 to vector<8x128xf32>
    %63 = arith.select %13, %61, %62 : vector<8x128xi1>, vector<8x128xf32>
    %64 = arith.addf %60, %63 : vector<8x128xf32>
    %c4_i32_29 = arith.constant 4 : i32
    %65 = tpu.dynamic_rotate %64 by %c4_i32_29 dim 1 : vector<8x128xf32>, i32 -> vector<8x128xf32>
    %cst_30 = arith.constant 0.000000e+00 : f32
    %66 = vector.broadcast %cst_30 : f32 to vector<8x128xf32>
    %67 = arith.select %19, %65, %66 : vector<8x128xi1>, vector<8x128xf32>
    %68 = arith.addf %64, %67 : vector<8x128xf32>
    %69 = arith.mulf %68, %27 : vector<8x128xf32>
    %c0_31 = arith.constant 0 : index
    %c0_32 = arith.constant 0 : index
    %c0_33 = arith.constant 0 : index
    %c0_34 = arith.constant 0 : index
    %70 = vector.load %arg4[%c0_31, %c0_32, %c0_33, %c0_34] : memref<1x3x8x128xf32, #tpu.memory_space<vmem>>, vector<1x1x8x128xf32>
    %71 = vector.shape_cast %70 : vector<1x1x8x128xf32> to vector<8x128xf32>
    %72 = vector.shape_cast %69 : vector<8x128xf32> to vector<1x1x8x128xf32>
    tpu.vector_store %arg4[%c0_31, %c0_32, %c0_33, %c0_34], %72 {strides = array<i32>} : memref<1x3x8x128xf32, #tpu.memory_space<vmem>>, vector<1x1x8x128xf32>,
    %c0_35 = arith.constant 0 : index
    %c0_36 = arith.constant 0 : index
    %c0_37 = arith.constant 0 : index
    %c0_38 = arith.constant 0 : index
    %73 = vector.load %arg5[%c0_35, %c0_36, %c0_37, %c0_38] : memref<1x3x8x128xf32, #tpu.memory_space<vmem>>, vector<1x1x8x128xf32>
    %74 = vector.shape_cast %73 : vector<1x1x8x128xf32> to vector<8x128xf32>
    %75 = vector.shape_cast %55 : vector<8x128xf32> to vector<1x1x8x128xf32>
    tpu.vector_store %arg5[%c0_35, %c0_36, %c0_37, %c0_38], %75 {strides = array<i32>} : memref<1x3x8x128xf32, #tpu.memory_space<vmem>>, vector<1x1x8x128xf32>,
    %c125_i32_39 = arith.constant 125 : i32
    %76 = tpu.dynamic_rotate %1 by %c125_i32_39 dim 1 : vector<8x128xf32>, i32 -> vector<8x128xf32>
    %cst_40 = arith.constant 0.000000e+00 : f32
    %77 = vector.broadcast %cst_40 : f32 to vector<8x128xf32>
    %78 = arith.select %42, %76, %77 : vector<8x128xi1>, vector<8x128xf32>
    %cst_41 = arith.constant 0.210526317 : f32
    %79 = vector.broadcast %cst_41 : f32 to vector<8x128xf32>
    %80 = arith.mulf %78, %79 : vector<8x128xf32>
    %c3_i32_42 = arith.constant 3 : i32
    %81 = tpu.dynamic_rotate %3 by %c3_i32_42 dim 1 : vector<8x128xf32>, i32 -> vector<8x128xf32>
    %cst_43 = arith.constant 0.000000e+00 : f32
    %82 = vector.broadcast %cst_43 : f32 to vector<8x128xf32>
    %83 = arith.select %49, %81, %82 : vector<8x128xi1>, vector<8x128xf32>
    %cst_44 = arith.constant 0.210526317 : f32
    %84 = vector.broadcast %cst_44 : f32 to vector<8x128xf32>
    %85 = arith.mulf %83, %84 : vector<8x128xf32>
    %c124_i32 = arith.constant 124 : i32
    %86 = tpu.dynamic_rotate %1 by %c124_i32 dim 1 : vector<8x128xf32>, i32 -> vector<8x128xf32>
    %c124_i32_45 = arith.constant 124 : i32
    %87 = vector.broadcast %c124_i32_45 : i32 to vector<8x128xi32>
    %88 = arith.cmpi slt, %4, %87 : vector<8x128xi32>
    %cst_46 = arith.constant 0.000000e+00 : f32
    %89 = vector.broadcast %cst_46 : f32 to vector<8x128xf32>
    %90 = arith.select %88, %86, %89 : vector<8x128xi1>, vector<8x128xf32>
    %cst_47 = arith.constant 0.789473712 : f32
    %91 = vector.broadcast %cst_47 : f32 to vector<8x128xf32>
    %92 = arith.mulf %90, %91 : vector<8x128xf32>
    %c4_i32_48 = arith.constant 4 : i32
    %93 = tpu.dynamic_rotate %3 by %c4_i32_48 dim 1 : vector<8x128xf32>, i32 -> vector<8x128xf32>
    %cst_49 = arith.constant 0.000000e+00 : f32
    %94 = vector.broadcast %cst_49 : f32 to vector<8x128xf32>
    %95 = arith.select %19, %93, %94 : vector<8x128xi1>, vector<8x128xf32>
    %cst_50 = arith.constant 0.789473712 : f32
    %96 = vector.broadcast %cst_50 : f32 to vector<8x128xf32>
    %97 = arith.mulf %95, %96 : vector<8x128xf32>
    %98 = arith.addf %80, %92 : vector<8x128xf32>
    %99 = arith.addf %85, %97 : vector<8x128xf32>
    %100 = arith.mulf %3, %98 : vector<8x128xf32>
    %c1_i32_51 = arith.constant 1 : i32
    %101 = tpu.dynamic_rotate %100 by %c1_i32_51 dim 1 : vector<8x128xf32>, i32 -> vector<8x128xf32>
    %cst_52 = arith.constant 0.000000e+00 : f32
    %102 = vector.broadcast %cst_52 : f32 to vector<8x128xf32>
    %103 = arith.select %7, %101, %102 : vector<8x128xi1>, vector<8x128xf32>
    %104 = arith.addf %100, %103 : vector<8x128xf32>
    %c2_i32_53 = arith.constant 2 : i32
    %105 = tpu.dynamic_rotate %104 by %c2_i32_53 dim 1 : vector<8x128xf32>, i32 -> vector<8x128xf32>
    %cst_54 = arith.constant 0.000000e+00 : f32
    %106 = vector.broadcast %cst_54 : f32 to vector<8x128xf32>
    %107 = arith.select %13, %105, %106 : vector<8x128xi1>, vector<8x128xf32>
    %108 = arith.addf %104, %107 : vector<8x128xf32>
    %c4_i32_55 = arith.constant 4 : i32
    %109 = tpu.dynamic_rotate %108 by %c4_i32_55 dim 1 : vector<8x128xf32>, i32 -> vector<8x128xf32>
    %cst_56 = arith.constant 0.000000e+00 : f32
    %110 = vector.broadcast %cst_56 : f32 to vector<8x128xf32>
    %111 = arith.select %19, %109, %110 : vector<8x128xi1>, vector<8x128xf32>
    %112 = arith.addf %108, %111 : vector<8x128xf32>
    %113 = arith.mulf %112, %27 : vector<8x128xf32>
    %c0_57 = arith.constant 0 : index
    %c1 = arith.constant 1 : index
    %c0_58 = arith.constant 0 : index
    %c0_59 = arith.constant 0 : index
    %114 = vector.load %arg4[%c0_57, %c1, %c0_58, %c0_59] : memref<1x3x8x128xf32, #tpu.memory_space<vmem>>, vector<1x1x8x128xf32>
    %115 = vector.shape_cast %114 : vector<1x1x8x128xf32> to vector<8x128xf32>
    %116 = vector.shape_cast %113 : vector<8x128xf32> to vector<1x1x8x128xf32>
    tpu.vector_store %arg4[%c0_57, %c1, %c0_58, %c0_59], %116 {strides = array<i32>} : memref<1x3x8x128xf32, #tpu.memory_space<vmem>>, vector<1x1x8x128xf32>,
    %c0_60 = arith.constant 0 : index
    %c1_61 = arith.constant 1 : index
    %c0_62 = arith.constant 0 : index
    %c0_63 = arith.constant 0 : index
    %117 = vector.load %arg5[%c0_60, %c1_61, %c0_62, %c0_63] : memref<1x3x8x128xf32, #tpu.memory_space<vmem>>, vector<1x1x8x128xf32>
    %118 = vector.shape_cast %117 : vector<1x1x8x128xf32> to vector<8x128xf32>
    %119 = vector.shape_cast %99 : vector<8x128xf32> to vector<1x1x8x128xf32>
    tpu.vector_store %arg5[%c0_60, %c1_61, %c0_62, %c0_63], %119 {strides = array<i32>} : memref<1x3x8x128xf32, #tpu.memory_space<vmem>>, vector<1x1x8x128xf32>,
    %c123_i32 = arith.constant 123 : i32
    %120 = tpu.dynamic_rotate %1 by %c123_i32 dim 1 : vector<8x128xf32>, i32 -> vector<8x128xf32>
    %c123_i32_64 = arith.constant 123 : i32
    %121 = vector.broadcast %c123_i32_64 : i32 to vector<8x128xi32>
    %122 = arith.cmpi slt, %4, %121 : vector<8x128xi32>
    %cst_65 = arith.constant 0.000000e+00 : f32
    %123 = vector.broadcast %cst_65 : f32 to vector<8x128xf32>
    %124 = arith.select %122, %120, %123 : vector<8x128xi1>, vector<8x128xf32>
    %cst_66 = arith.constant 0.105263159 : f32
    %125 = vector.broadcast %cst_66 : f32 to vector<8x128xf32>
    %126 = arith.mulf %124, %125 : vector<8x128xf32>
    %c5_i32 = arith.constant 5 : i32
    %127 = tpu.dynamic_rotate %3 by %c5_i32 dim 1 : vector<8x128xf32>, i32 -> vector<8x128xf32>
    %c5_i32_67 = arith.constant 5 : i32
    %128 = vector.broadcast %c5_i32_67 : i32 to vector<8x128xi32>
    %129 = arith.cmpi sge, %4, %128 : vector<8x128xi32>
    %cst_68 = arith.constant 0.000000e+00 : f32
    %130 = vector.broadcast %cst_68 : f32 to vector<8x128xf32>
    %131 = arith.select %129, %127, %130 : vector<8x128xi1>, vector<8x128xf32>
    %cst_69 = arith.constant 0.105263159 : f32
    %132 = vector.broadcast %cst_69 : f32 to vector<8x128xf32>
    %133 = arith.mulf %131, %132 : vector<8x128xf32>
    %c122_i32 = arith.constant 122 : i32
    %134 = tpu.dynamic_rotate %1 by %c122_i32 dim 1 : vector<8x128xf32>, i32 -> vector<8x128xf32>
    %c122_i32_70 = arith.constant 122 : i32
    %135 = vector.broadcast %c122_i32_70 : i32 to vector<8x128xi32>
    %136 = arith.cmpi slt, %4, %135 : vector<8x128xi32>
    %cst_71 = arith.constant 0.000000e+00 : f32
    %137 = vector.broadcast %cst_71 : f32 to vector<8x128xf32>
    %138 = arith.select %136, %134, %137 : vector<8x128xi1>, vector<8x128xf32>
    %cst_72 = arith.constant 0.894736826 : f32
    %139 = vector.broadcast %cst_72 : f32 to vector<8x128xf32>
    %140 = arith.mulf %138, %139 : vector<8x128xf32>
    %c6_i32 = arith.constant 6 : i32
    %141 = tpu.dynamic_rotate %3 by %c6_i32 dim 1 : vector<8x128xf32>, i32 -> vector<8x128xf32>
    %c6_i32_73 = arith.constant 6 : i32
    %142 = vector.broadcast %c6_i32_73 : i32 to vector<8x128xi32>
    %143 = arith.cmpi sge, %4, %142 : vector<8x128xi32>
    %cst_74 = arith.constant 0.000000e+00 : f32
    %144 = vector.broadcast %cst_74 : f32 to vector<8x128xf32>
    %145 = arith.select %143, %141, %144 : vector<8x128xi1>, vector<8x128xf32>
    %cst_75 = arith.constant 0.894736826 : f32
    %146 = vector.broadcast %cst_75 : f32 to vector<8x128xf32>
    %147 = arith.mulf %145, %146 : vector<8x128xf32>
    %148 = arith.addf %126, %140 : vector<8x128xf32>
    %149 = arith.addf %133, %147 : vector<8x128xf32>
    %150 = arith.mulf %3, %148 : vector<8x128xf32>
    %c1_i32_76 = arith.constant 1 : i32
    %151 = tpu.dynamic_rotate %150 by %c1_i32_76 dim 1 : vector<8x128xf32>, i32 -> vector<8x128xf32>
    %cst_77 = arith.constant 0.000000e+00 : f32
    %152 = vector.broadcast %cst_77 : f32 to vector<8x128xf32>
    %153 = arith.select %7, %151, %152 : vector<8x128xi1>, vector<8x128xf32>
    %154 = arith.addf %150, %153 : vector<8x128xf32>
    %c2_i32_78 = arith.constant 2 : i32
    %155 = tpu.dynamic_rotate %154 by %c2_i32_78 dim 1 : vector<8x128xf32>, i32 -> vector<8x128xf32>
    %cst_79 = arith.constant 0.000000e+00 : f32
    %156 = vector.broadcast %cst_79 : f32 to vector<8x128xf32>
    %157 = arith.select %13, %155, %156 : vector<8x128xi1>, vector<8x128xf32>
    %158 = arith.addf %154, %157 : vector<8x128xf32>
    %c4_i32_80 = arith.constant 4 : i32
    %159 = tpu.dynamic_rotate %158 by %c4_i32_80 dim 1 : vector<8x128xf32>, i32 -> vector<8x128xf32>
    %cst_81 = arith.constant 0.000000e+00 : f32
    %160 = vector.broadcast %cst_81 : f32 to vector<8x128xf32>
    %161 = arith.select %19, %159, %160 : vector<8x128xi1>, vector<8x128xf32>
    %162 = arith.addf %158, %161 : vector<8x128xf32>
    %163 = arith.mulf %162, %27 : vector<8x128xf32>
    %c0_82 = arith.constant 0 : index
    %c2 = arith.constant 2 : index
    %c0_83 = arith.constant 0 : index
    %c0_84 = arith.constant 0 : index
    %164 = vector.load %arg4[%c0_82, %c2, %c0_83, %c0_84] : memref<1x3x8x128xf32, #tpu.memory_space<vmem>>, vector<1x1x8x128xf32>
    %165 = vector.shape_cast %164 : vector<1x1x8x128xf32> to vector<8x128xf32>
    %166 = vector.shape_cast %163 : vector<8x128xf32> to vector<1x1x8x128xf32>
    tpu.vector_store %arg4[%c0_82, %c2, %c0_83, %c0_84], %166 {strides = array<i32>} : memref<1x3x8x128xf32, #tpu.memory_space<vmem>>, vector<1x1x8x128xf32>,
    %c0_85 = arith.constant 0 : index
    %c2_86 = arith.constant 2 : index
    %c0_87 = arith.constant 0 : index
    %c0_88 = arith.constant 0 : index
    %167 = vector.load %arg5[%c0_85, %c2_86, %c0_87, %c0_88] : memref<1x3x8x128xf32, #tpu.memory_space<vmem>>, vector<1x1x8x128xf32>
    %168 = vector.shape_cast %167 : vector<1x1x8x128xf32> to vector<8x128xf32>
    %169 = vector.shape_cast %149 : vector<8x128xf32> to vector<1x1x8x128xf32>
    tpu.vector_store %arg5[%c0_85, %c2_86, %c0_87, %c0_88], %169 {strides = array<i32>} : memref<1x3x8x128xf32, #tpu.memory_space<vmem>>, vector<1x1x8x128xf32>,
    return
  }
  func.func @transform_0(%arg0: i32, %arg1: i32) -> (i32, i32, i32, i32) {
    %c0_i32 = arith.constant 0 : i32
    %c0_i32_0 = arith.constant 0 : i32
    %c0_i32_1 = arith.constant 0 : i32
    return %arg0, %c0_i32, %arg1, %c0_i32_0 : i32, i32, i32, i32
  }
  func.func @transform_1(%arg0: i32, %arg1: i32) -> (i32, i32, i32, i32) {
    %c0_i32 = arith.constant 0 : i32
    %c0_i32_0 = arith.constant 0 : i32
    %c0_i32_1 = arith.constant 0 : i32
    return %arg0, %c0_i32, %arg1, %c0_i32_0 : i32, i32, i32, i32
  }
  func.func @transform_2(%arg0: i32, %arg1: i32) -> (i32, i32, i32, i32) {
    %c0_i32 = arith.constant 0 : i32
    %c0_i32_0 = arith.constant 0 : i32
    %c0_i32_1 = arith.constant 0 : i32
    return %arg0, %c0_i32, %arg1, %c0_i32_0 : i32, i32, i32, i32
  }
  func.func @transform_3(%arg0: i32, %arg1: i32) -> (i32, i32, i32, i32) {
    %c0_i32 = arith.constant 0 : i32
    %c0_i32_0 = arith.constant 0 : i32
    %c0_i32_1 = arith.constant 0 : i32
    return %arg0, %c0_i32, %arg1, %c0_i32_0 : i32, i32, i32, i32
  }
}

</mosaic_0001>

<llo_original>
// kernel: tpu_custom_call.1
$region0: #{tpu_custom_call.1}
  #allocation0 [shape = 'u32[]', space=smem, size = 0x4, offset = 0x4, fixed_abs, tag = 'smem constant byte address 0x4 - core index']
  #allocation1 [shape = 'u32[72,128]{1,0:T(1,128)}', space=vmem, size = 0x9000, scoped, tag = 'internal scratch']
  %s0 = inlined_call_operand.hbm [shape: f32[2,1,16,128], index: 0, kind: input, shape index: {}]
  %s1 = inlined_call_operand.hbm [shape: f32[2,1,16,128], index: 1, kind: input, shape index: {}]
  %s2 = inlined_call_operand.hbm [shape: f32[2,3,16,128], index: 2, kind: output, shape index: {0}]
  %s3 = inlined_call_operand.hbm [shape: f32[2,3,16,128], index: 3, kind: output, shape index: {1}]
  %4 = xla_tuple %s2, %s3
  %s5 = sld [smem:[#allocation0]]
  $region57: #{tpu_custom_call.1} parent=0
    _
  %s7 = ssub.s32 1, %s5
  %s8 = scalar_select 0, %s7, %s5
  $region1: #{tpu_custom_call.1} parent=0
    #allocation2 [shape = 'u8[8192]{0}', space=vmem, size = 0x2000, scoped, tag = 'input window, operand 0']
    #allocation3 [shape = 's32[2]{0}', space=sflag, size = 0x8, scoped, tag = 'scoped memory for tpu_custom_call.1']
    #allocation4 [shape = 's32[2]{0}', space=sflag, size = 0x8, scoped, tag = 'scoped memory for tpu_custom_call.1']
    #allocation5 [shape = 'u8[8192]{0}', space=vmem, size = 0x2000, scoped, tag = 'input window, operand 1']
    #allocation6 [shape = 's32[2]{0}', space=sflag, size = 0x8, scoped, tag = 'scoped memory for tpu_custom_call.1']
    #allocation7 [shape = 'u8[24576]{0}', space=vmem, size = 0x6000, scoped, tag = 'output window, operand 0']
    #allocation8 [shape = 'u8[24576]{0}', space=vmem, size = 0x6000, scoped, tag = 'output window, operand 1']
    #allocation9 [shape = 's32[2]{0}', space=sflag, size = 0x8, scoped, tag = 'scoped memory for tpu_custom_call.1']
    %9 = vsyncpa [#allocation3], 0
    %s10 = scalar_lea.sflag [#allocation3], 1
    %11 = vsyncpa %s10, 0
    %12 = vsyncpa [#allocation6], 0
    %s13 = scalar_lea.sflag [#allocation6], 1
    %14 = vsyncpa %s13, 0
    %15 = vsyncpa [#allocation4], 0
    %s16 = scalar_lea.sflag [#allocation4], 1
    %17 = vsyncpa %s16, 0
    %18 = vsyncpa [#allocation9], 0
    %s19 = scalar_lea.sflag [#allocation9], 1
    %20 = vsyncpa %s19, 0
    loop: start=0, step=1, limit=6
    $region2: #{tpu_custom_call.1} parent=1 // loop_pre_header
      _
    $region3: #{tpu_custom_call.1} parent=1 // loop_header
      %s22 = sphi 0, %s26
      %p23 = scmp.ge.s32.totalorder %s22, 6
      %s29 = sphi 0, %s41
      %s30 = sphi 0, %s37
      %s31 = sphi 0, %s29
      %s32 = sphi 0, %s30
      %s33 = sphi 0, %s31
      %s34 = sphi 0, %s32
      %s46 = sphi 0, %s48
      %s49 = sphi 0, %s46
      %s50 = sphi 0, %s49
      %s66 = sphi 0, %s50
      %s74 = sphi 0, %s76
      %s77 = sphi 0, %s74
      %s78 = sphi 0, %s77
      %s94 = sphi 0, %s78
      %s102 = sphi 0, %s104
      %s105 = sphi 0, %s102
      %s106 = sphi 0, %s105
      %s122 = sphi 0, %s106
      %s130 = sphi 0, %s132
      %s133 = sphi 0, %s130
      %s134 = sphi 0, %s133
      %s150 = sphi 0, %s134
    $region4: #{tpu_custom_call.1} parent=1 // loop_header_branch
      %25 = sbr.rel (%p23) target = $region8
    $region5: #{tpu_custom_call.1} parent=1 // loop_body
      %s27 = ssub.s32 %s22, 1
      %s28 = ssub.s32 %s22, 2
      %s35 = sadd.s32 1, %s30
      %p36 = scmp.ge.s32.totalorder %s35, 2
      %s37 = scalar_select %p36, 0, %s35
      %s38 = sadd.s32 1, %s29
      %s39 = scalar_select %p36, %s38, %s29
      %p40 = scmp.ge.s32.totalorder %s39, 2
      %s41 = scalar_select %p40, 0, %s39
      %s42 = ssub.s32 %s29, %s41
      %s43 = ssub.s32 %s30, %s37
      %s44 = sor.u32 %s42, %s43
      %p45 = scmp.eq.s32.totalorder %s44, 0
      %s47 = sadd.s32 %s46, 1
      %s48 = scalar_select %p45, %s46, %s47
      %p51 = pneg %p45
      %p52 = scmp.eq.s32.totalorder %s22, 3
      %p53 = por %p51, %p52
      %p54 = scmp.ne.s32.totalorder %s46, %s49
      %p55 = scmp.eq.s32.totalorder %s22, 0
      %p56 = por %p54, %p55
      %p57 = scmp.ne.s32.totalorder %s46, %s49
      %p58 = scmp.eq.s32.totalorder %s27, 3
      %p59 = por %p57, %p58
      %p60 = scmp.ne.s32.totalorder %s49, %s50
      %p61 = scmp.eq.s32.totalorder %s27, 0
      %p62 = por %p60, %p61
      %p63 = scmp.ne.s32.totalorder %s49, %s50
      %p64 = scmp.eq.s32.totalorder %s28, 3
      %p65 = por %p63, %p64
      %p67 = scmp.ne.s32.totalorder %s50, %s66
      %p68 = scmp.eq.s32.totalorder %s28, 0
      %p69 = por %p67, %p68
      %s70 = ssub.s32 %s29, %s41
      %s71 = ssub.s32 %s30, %s37
      %s72 = sor.u32 %s70, %s71
      %p73 = scmp.eq.s32.totalorder %s72, 0
      %s75 = sadd.s32 %s74, 1
      %s76 = scalar_select %p73, %s74, %s75
      %p79 = pneg %p73
      %p80 = scmp.eq.s32.totalorder %s22, 3
      %p81 = por %p79, %p80
      %p82 = scmp.ne.s32.totalorder %s74, %s77
      %p83 = scmp.eq.s32.totalorder %s22, 0
      %p84 = por %p82, %p83
      %p85 = scmp.ne.s32.totalorder %s74, %s77
      %p86 = scmp.eq.s32.totalorder %s27, 3
      %p87 = por %p85, %p86
      %p88 = scmp.ne.s32.totalorder %s77, %s78
      %p89 = scmp.eq.s32.totalorder %s27, 0
      %p90 = por %p88, %p89
      %p91 = scmp.ne.s32.totalorder %s77, %s78
      %p92 = scmp.eq.s32.totalorder %s28, 3
      %p93 = por %p91, %p92
      %p95 = scmp.ne.s32.totalorder %s78, %s94
      %p96 = scmp.eq.s32.totalorder %s28, 0
      %p97 = por %p95, %p96
      %s98 = ssub.s32 %s29, %s41
      %s99 = ssub.s32 %s30, %s37
      %s100 = sor.u32 %s98, %s99
      %p101 = scmp.eq.s32.totalorder %s100, 0
      %s103 = sadd.s32 %s102, 1
      %s104 = scalar_select %p101, %s102, %s103
      %p107 = pneg %p101
      %p108 = scmp.eq.s32.totalorder %s22, 3
      %p109 = por %p107, %p108
      %p110 = scmp.ne.s32.totalorder %s102, %s105
      %p111 = scmp.eq.s32.totalorder %s22, 0
      %p112 = por %p110, %p111
      %p113 = scmp.ne.s32.totalorder %s102, %s105
      %p114 = scmp.eq.s32.totalorder %s27, 3
      %p115 = por %p113, %p114
      %p116 = scmp.ne.s32.totalorder %s105, %s106
      %p117 = scmp.eq.s32.totalorder %s27, 0
      %p118 = por %p116, %p117
      %p119 = scmp.ne.s32.totalorder %s105, %s106
      %p120 = scmp.eq.s32.totalorder %s28, 3
      %p121 = por %p119, %p120
      %p123 = scmp.ne.s32.totalorder %s106, %s122
      %p124 = scmp.eq.s32.totalorder %s28, 0
      %p125 = por %p123, %p124
      %s126 = ssub.s32 %s29, %s41
      %s127 = ssub.s32 %s30, %s37
      %s128 = sor.u32 %s126, %s127
      %p129 = scmp.eq.s32.totalorder %s128, 0
      %s131 = sadd.s32 %s130, 1
      %s132 = scalar_select %p129, %s130, %s131
      %p135 = pneg %p129
      %p136 = scmp.eq.s32.totalorder %s22, 3
      %p137 = por %p135, %p136
      %p138 = scmp.ne.s32.totalorder %s130, %s133
      %p139 = scmp.eq.s32.totalorder %s22, 0
      %p140 = por %p138, %p139
      %p141 = scmp.ne.s32.totalorder %s130, %s133
      %p142 = scmp.eq.s32.totalorder %s27, 3
      %p143 = por %p141, %p142
      %p144 = scmp.ne.s32.totalorder %s133, %s134
      %p145 = scmp.eq.s32.totalorder %s27, 0
      %p146 = por %p144, %p145
      %p147 = scmp.ne.s32.totalorder %s133, %s134
      %p148 = scmp.eq.s32.totalorder %s28, 3
      %p149 = por %p147, %p148
      %p151 = scmp.ne.s32.totalorder %s134, %s150
      %p152 = scmp.eq.s32.totalorder %s28, 0
      %p153 = por %p151, %p152
      %p154 = scmp.le.s32.totalorder 1, %s22
      %p155 = scmp.lt.s32.totalorder %s22, 5
      %p156 = pnand %p154, %p155
      %p157 = pneg %p156
      // Predicated region
      $region9: #{tpu_custom_call.1} parent=5 // pred_check
        _
      $region10: #{tpu_custom_call.1} parent=5 // pred_check_branch
        %159 = sbr.rel (%p156) target = $region12
      $region11: #{tpu_custom_call.1} parent=5 // pred_region
        %s160 = ssub.s32 %s22, 1
      $region12: #{tpu_custom_call.1} parent=5 // pred_fallthru
        _
      %p161 = scmp.lt.s32.totalorder %s22, 4
      // Predicated region
      $region13: #{tpu_custom_call.1} parent=5 // pred_check
        %p162 = pneg %p161
      $region14: #{tpu_custom_call.1} parent=5 // pred_check_branch
        %164 = sbr.rel (%p162) target = $region16
      $region15: #{tpu_custom_call.1} parent=5 // pred_region
        // Predicated region
        $region17: #{tpu_custom_call.1} parent=15 // pred_check
          %p165 = pneg %p56
        $region18: #{tpu_custom_call.1} parent=15 // pred_check_branch
          %167 = sbr.rel (%p165) target = $region20
        $region19: #{tpu_custom_call.1} parent=15 // pred_region
          %s168 = sand.u32 %s46, 1
          %s169 = scalar_lea.sflag [#allocation3], %s168
          %s170 = sand.u32 %s46, 1
          %s171 = smul.addr %s170, 8
          %s172 = scalar_lea.vmem [#allocation2], %s171
          %174 = vsyncadd %s169, 0
          %s175 = smul.addr %s29, 2
          %s176 = sadd.s32 %s30, %s175
          %s177 = smul.addr %s176, 8
          %s178 = scalar_lea.hbm %s0, %s177
          %s180 = sshll.u32 %s178, 4
          %s181 = int_to_ptr.hbm [resolvable:$true] %s180
          %s182 = sshll.u32 %s172, 4
          %s183 = int_to_ptr.vmem [resolvable:$true] %s182
          %185 = dma.hbm_to_vmem [thread:$0]  %s181, 128, %s183, %s169
        $region20: #{tpu_custom_call.1} parent=15 // pred_fallthru
          _
        // Predicated region
        $region21: #{tpu_custom_call.1} parent=15 // pred_check
          %p186 = pneg %p84
        $region22: #{tpu_custom_call.1} parent=15 // pred_check_branch
          %188 = sbr.rel (%p186) target = $region24
        $region23: #{tpu_custom_call.1} parent=15 // pred_region
          %s189 = sand.u32 %s74, 1
          %s190 = scalar_lea.sflag [#allocation6], %s189
          %s191 = sand.u32 %s74, 1
          %s192 = smul.addr %s191, 8
          %s193 = scalar_lea.vmem [#allocation5], %s192
          %195 = vsyncadd %s190, 0
          %s196 = smul.addr %s29, 2
          %s197 = sadd.s32 %s30, %s196
          %s198 = smul.addr %s197, 8
          %s199 = scalar_lea.hbm %s1, %s198
          %s201 = sshll.u32 %s199, 4
          %s202 = int_to_ptr.hbm [resolvable:$true] %s201
          %s203 = sshll.u32 %s193, 4
          %s204 = int_to_ptr.vmem [resolvable:$true] %s203
          %206 = dma.hbm_to_vmem [thread:$0]  %s202, 128, %s204, %s190
        $region24: #{tpu_custom_call.1} parent=15 // pred_fallthru
          _
      $region16: #{tpu_custom_call.1} parent=5 // pred_fallthru
        _
      %p207 = scmp.le.s32.totalorder 1, %s22
      %p208 = scmp.lt.s32.totalorder %s22, 5
      %p209 = pnand %p207, %p208
      %p210 = pneg %p209
      // Predicated region
      $region25: #{tpu_custom_call.1} parent=5 // pred_check
        _
      $region26: #{tpu_custom_call.1} parent=5 // pred_check_branch
        %212 = sbr.rel (%p209) target = $region28
      $region27: #{tpu_custom_call.1} parent=5 // pred_region
        %s213 = ssub.s32 %s22, 1
        %s214 = sand.u32 %s49, 1
        %s215 = scalar_lea.sflag [#allocation3], %s214
        %s216 = sand.u32 %s49, 1
        %s217 = smul.addr %s216, 8
        %s218 = scalar_lea.vmem [#allocation2], %s217
        // Predicated region
        $region29: #{tpu_custom_call.1} parent=27 // pred_check
          %p219 = pneg %p62
        $region30: #{tpu_custom_call.1} parent=27 // pred_check_branch
          %221 = sbr.rel (%p219) target = $region32
        $region31: #{tpu_custom_call.1} parent=27 // pred_region
          %223 = dma.done %s215, 128
        $region32: #{tpu_custom_call.1} parent=27 // pred_fallthru
          _
        %s224 = sand.u32 %s77, 1
        %s225 = scalar_lea.sflag [#allocation6], %s224
        %s226 = sand.u32 %s77, 1
        %s227 = smul.addr %s226, 8
        %s228 = scalar_lea.vmem [#allocation5], %s227
        // Predicated region
        $region33: #{tpu_custom_call.1} parent=27 // pred_check
          %p229 = pneg %p90
        $region34: #{tpu_custom_call.1} parent=27 // pred_check_branch
          %231 = sbr.rel (%p229) target = $region36
        $region35: #{tpu_custom_call.1} parent=27 // pred_region
          %233 = dma.done %s225, 128
        $region36: #{tpu_custom_call.1} parent=27 // pred_fallthru
          _
        %s234 = sand.u32 %s49, 1
        %s235 = scalar_lea.sflag [#allocation3], %s234
        %s236 = sand.u32 %s49, 1
        %s237 = smul.addr %s236, 8
        %s238 = scalar_lea.vmem [#allocation2], %s237
        %p239 = pneg %p62
        %p240 = pneg %p59
        %s241 = sand.u32 %s77, 1
        %s242 = scalar_lea.sflag [#allocation6], %s241
        %s243 = sand.u32 %s77, 1
        %s244 = smul.addr %s243, 8
        %s245 = scalar_lea.vmem [#allocation5], %s244
        %p246 = pneg %p90
        %p247 = pneg %p87
        %p248 = pneg %p118
        %p249 = pneg %p115
        %s250 = sand.u32 %s105, 1
        %s251 = scalar_lea.sflag [#allocation4], %s250
        %s252 = sand.u32 %s105, 1
        %s253 = smul.addr %s252, 24
        %s254 = scalar_lea.vmem [#allocation7], %s253
        %p255 = pneg %p146
        %p256 = pneg %p143
        %s257 = sand.u32 %s133, 1
        %s258 = scalar_lea.sflag [#allocation9], %s257
        %s259 = sand.u32 %s133, 1
        %s260 = smul.addr %s259, 24
        %s261 = scalar_lea.vmem [#allocation8], %s260
        %v262 = vld [vmem:[%s218] sm:$0xff]
        %v263 = vld [vmem:[%s228] sm:$0xff]
        %v264 = vlaneseq
        %v265 = vand.u32 %v264, 127
        %266 = vrot.lane.b32.xlu0 %v263, 1
        %v267 = vpop.permute.xlu0 %266
        %vm268 = vcmp.ge.s32.totalorder %v265, 1
        %v269 = vsel %vm268, %v267, 0.0
        %v270 = vadd.f32 %v263, %v269
        %271 = vrot.lane.b32.xlu0 %v270, 2
        %v272 = vpop.permute.xlu0 %271
        %vm273 = vcmp.ge.s32.totalorder %v265, 2
        %v274 = vsel %vm273, %v272, 0.0
        %v275 = vadd.f32 %v270, %v274
        %276 = vrot.lane.b32.xlu0 %v275, 4
        %v277 = vpop.permute.xlu0 %276
        %vm278 = vcmp.ge.s32.totalorder %v265, 4
        %v279 = vsel %vm278, %v277, 0.0
        %v280 = vadd.f32 %v275, %v279
        %v281 = vrcp.pop %v280
        %v282 = vmul.f32 %v280, %v281
        %v283 = vsub.f32 2.0, %v282
        %v284 = vmul.f32 %v281, %v283
        %285 = vrot.lane.b32.xlu0 %v262, 126
        %v286 = vpop.permute.xlu0 %285
        %vm287 = vcmp.lt.s32.totalorder %v265, 126
        %v288 = vsel %vm287, %v286, 0.0
        %v289 = vmul.f32 %v288, 0.8947368
        %290 = vrot.lane.b32.xlu0 %v263, 2
        %v291 = vpop.permute.xlu0 %290
        %v292 = vsel %vm273, %v291, 0.0
        %v293 = vmul.f32 %v292, 0.8947368
        %294 = vrot.lane.b32.xlu0 %v262, 125
        %v295 = vpop.permute.xlu0 %294
        %vm296 = vcmp.lt.s32.totalorder %v265, 125
        %v297 = vsel %vm296, %v295, 0.0
        %v298 = vmul.f32 %v297, 0.10526316
        %299 = vrot.lane.b32.xlu0 %v263, 3
        %v300 = vpop.permute.xlu0 %299
        %vm301 = vcmp.ge.s32.totalorder %v265, 3
        %v302 = vsel %vm301, %v300, 0.0
        %v303 = vmul.f32 %v302, 0.10526316
        %v304 = vadd.f32 %v289, %v298
        %v305 = vadd.f32 %v293, %v303
        %v306 = vmul.f32 %v263, %v304
        %307 = vrot.lane.b32.xlu0 %v306, 1
        %v308 = vpop.permute.xlu0 %307
        %v309 = vsel %vm268, %v308, 0.0
        %v310 = vadd.f32 %v306, %v309
        %311 = vrot.lane.b32.xlu0 %v310, 2
        %v312 = vpop.permute.xlu0 %311
        %v313 = vsel %vm273, %v312, 0.0
        %v314 = vadd.f32 %v310, %v313
        %315 = vrot.lane.b32.xlu0 %v314, 4
        %v316 = vpop.permute.xlu0 %315
        %v317 = vsel %vm278, %v316, 0.0
        %v318 = vadd.f32 %v314, %v317
        %v319 = vmul.f32 %v318, %v284
        %320 = vst [vmem:[%s254] sm:$0xff] %v319
        %321 = vst [vmem:[%s261] sm:$0xff] %v305
        %v322 = vmul.f32 %v297, 0.21052632
        %v323 = vmul.f32 %v302, 0.21052632
        %324 = vrot.lane.b32.xlu0 %v262, 124
        %v325 = vpop.permute.xlu0 %324
        %vm326 = vcmp.lt.s32.totalorder %v265, 124
        %v327 = vsel %vm326, %v325, 0.0
        %v328 = vmul.f32 %v327, 0.7894737
        %329 = vrot.lane.b32.xlu0 %v263, 4
        %v330 = vpop.permute.xlu0 %329
        %v331 = vsel %vm278, %v330, 0.0
        %v332 = vmul.f32 %v331, 0.7894737
        %v333 = vadd.f32 %v322, %v328
        %v334 = vadd.f32 %v323, %v332
        %v335 = vmul.f32 %v263, %v333
        %336 = vrot.lane.b32.xlu0 %v335, 1
        %v337 = vpop.permute.xlu0 %336
        %v338 = vsel %vm268, %v337, 0.0
        %v339 = vadd.f32 %v335, %v338
        %340 = vrot.lane.b32.xlu0 %v339, 2
        %v341 = vpop.permute.xlu0 %340
        %v342 = vsel %vm273, %v341, 0.0
        %v343 = vadd.f32 %v339, %v342
        %344 = vrot.lane.b32.xlu0 %v343, 4
        %v345 = vpop.permute.xlu0 %344
        %v346 = vsel %vm278, %v345, 0.0
        %v347 = vadd.f32 %v343, %v346
        %v348 = vmul.f32 %v347, %v284
        %s349 = scalar_lea.vmem %s254, 8 [#allocation7]
        %350 = vst [vmem:[%s349] sm:$0xff] %v348
        %s351 = scalar_lea.vmem %s261, 8 [#allocation8]
        %352 = vst [vmem:[%s351] sm:$0xff] %v334
        %353 = vrot.lane.b32.xlu0 %v262, 123
        %v354 = vpop.permute.xlu0 %353
        %vm355 = vcmp.lt.s32.totalorder %v265, 123
        %v356 = vsel %vm355, %v354, 0.0
        %v357 = vmul.f32 %v356, 0.10526316
        %358 = vrot.lane.b32.xlu0 %v263, 5
        %v359 = vpop.permute.xlu0 %358
        %vm360 = vcmp.ge.s32.totalorder %v265, 5
        %v361 = vsel %vm360, %v359, 0.0
        %v362 = vmul.f32 %v361, 0.10526316
        %363 = vrot.lane.b32.xlu0 %v262, 122
        %v364 = vpop.permute.xlu0 %363
        %vm365 = vcmp.lt.s32.totalorder %v265, 122
        %v366 = vsel %vm365, %v364, 0.0
        %v367 = vmul.f32 %v366, 0.8947368
        %368 = vrot.lane.b32.xlu0 %v263, 6
        %v369 = vpop.permute.xlu0 %368
        %vm370 = vcmp.ge.s32.totalorder %v265, 6
        %v371 = vsel %vm370, %v369, 0.0
        %v372 = vmul.f32 %v371, 0.8947368
        %v373 = vadd.f32 %v357, %v367
        %v374 = vadd.f32 %v362, %v372
        %v375 = vmul.f32 %v263, %v373
        %376 = vrot.lane.b32.xlu0 %v375, 1
        %v377 = vpop.permute.xlu0 %376
        %v378 = vsel %vm268, %v377, 0.0
        %v379 = vadd.f32 %v375, %v378
        %380 = vrot.lane.b32.xlu0 %v379, 2
        %v381 = vpop.permute.xlu0 %380
        %v382 = vsel %vm273, %v381, 0.0
        %v383 = vadd.f32 %v379, %v382
        %384 = vrot.lane.b32.xlu0 %v383, 4
        %v385 = vpop.permute.xlu0 %384
        %v386 = vsel %vm278, %v385, 0.0
        %v387 = vadd.f32 %v383, %v386
        %v388 = vmul.f32 %v387, %v284
        %s389 = scalar_lea.vmem %s254, 16 [#allocation7]
        %390 = vst [vmem:[%s389] sm:$0xff] %v388
        %s391 = scalar_lea.vmem %s261, 16 [#allocation8]
        %392 = vst [vmem:[%s391] sm:$0xff] %v374
        %s393 = sand.u32 %s105, 1
        %s394 = scalar_lea.sflag [#allocation4], %s393
        %s395 = sand.u32 %s105, 1
        %s396 = smul.addr %s395, 24
        %s397 = scalar_lea.vmem [#allocation7], %s396
        %s398 = sand.u32 %s133, 1
        %s399 = scalar_lea.sflag [#allocation9], %s398
        %s400 = sand.u32 %s133, 1
        %s401 = smul.addr %s400, 24
        %s402 = scalar_lea.vmem [#allocation8], %s401
        // Predicated region
        $region37: #{tpu_custom_call.1} parent=27 // pred_check
          %p403 = pneg %p115
        $region38: #{tpu_custom_call.1} parent=27 // pred_check_branch
          %405 = sbr.rel (%p403) target = $region40
        $region39: #{tpu_custom_call.1} parent=27 // pred_region
          %407 = vsyncadd %s394, 0
          %s408 = smul.addr %s31, 6
          %s409 = sadd.s32 %s32, %s408
          %s410 = smul.addr %s409, 8
          %s411 = scalar_lea.hbm %s2, %s410
          %s412 = sshll.u32 %s397, 4
          %s413 = int_to_ptr.vmem [resolvable:$true] %s412
          %s414 = sshll.u32 %s411, 4
          %s415 = int_to_ptr.hbm [resolvable:$true] %s414
          %420 = dma.vmem_to_hbm [thread:$0]  %s413, 384, %s415, %s394, 128, 256, 8
        $region40: #{tpu_custom_call.1} parent=27 // pred_fallthru
          _
        // Predicated region
        $region41: #{tpu_custom_call.1} parent=27 // pred_check
          %p421 = pneg %p143
        $region42: #{tpu_custom_call.1} parent=27 // pred_check_branch
          %423 = sbr.rel (%p421) target = $region44
        $region43: #{tpu_custom_call.1} parent=27 // pred_region
          %425 = vsyncadd %s399, 0
          %s426 = smul.addr %s31, 6
          %s427 = sadd.s32 %s32, %s426
          %s428 = smul.addr %s427, 8
          %s429 = scalar_lea.hbm %s3, %s428
          %s430 = sshll.u32 %s402, 4
          %s431 = int_to_ptr.vmem [resolvable:$true] %s430
          %s432 = sshll.u32 %s429, 4
          %s433 = int_to_ptr.hbm [resolvable:$true] %s432
          %438 = dma.vmem_to_hbm [thread:$0]  %s431, 384, %s433, %s399, 128, 256, 8
        $region44: #{tpu_custom_call.1} parent=27 // pred_fallthru
          _
      $region28: #{tpu_custom_call.1} parent=5 // pred_fallthru
        _
      %p439 = scmp.le.s32.totalorder 2, %s22
      // Predicated region
      $region45: #{tpu_custom_call.1} parent=5 // pred_check
        %p440 = pneg %p439
      $region46: #{tpu_custom_call.1} parent=5 // pred_check_branch
        %442 = sbr.rel (%p440) target = $region48
      $region47: #{tpu_custom_call.1} parent=5 // pred_region
        %s443 = ssub.s32 %s22, 2
        // Predicated region
        $region49: #{tpu_custom_call.1} parent=47 // pred_check
          %p444 = pneg %p121
        $region50: #{tpu_custom_call.1} parent=47 // pred_check_branch
          %446 = sbr.rel (%p444) target = $region52
        $region51: #{tpu_custom_call.1} parent=47 // pred_region
          %s447 = sand.u32 %s106, 1
          %s448 = scalar_lea.sflag [#allocation4], %s447
          %s449 = sand.u32 %s106, 1
          %s450 = smul.addr %s449, 24
          %s451 = scalar_lea.vmem [#allocation7], %s450
          %453 = dma.done %s448, 384
        $region52: #{tpu_custom_call.1} parent=47 // pred_fallthru
          _
        // Predicated region
        $region53: #{tpu_custom_call.1} parent=47 // pred_check
          %p454 = pneg %p149
        $region54: #{tpu_custom_call.1} parent=47 // pred_check_branch
          %456 = sbr.rel (%p454) target = $region56
        $region55: #{tpu_custom_call.1} parent=47 // pred_region
          %s457 = sand.u32 %s134, 1
          %s458 = scalar_lea.sflag [#allocation9], %s457
          %s459 = sand.u32 %s134, 1
          %s460 = smul.addr %s459, 24
          %s461 = scalar_lea.vmem [#allocation8], %s460
          %463 = dma.done %s458, 384
        $region56: #{tpu_custom_call.1} parent=47 // pred_fallthru
          _
      $region48: #{tpu_custom_call.1} parent=5 // pred_fallthru
        _
    $region6: #{tpu_custom_call.1} parent=1 // loop_footer
      %s26 = sadd.s32 1, %s22
    $region7: #{tpu_custom_call.1} parent=1 // loop_footer_branch
      %21 = sbr.rel target = $region3
    $region8: #{tpu_custom_call.1} parent=1 // loop_exit
      _
    %464 = vsyncpa [#allocation3], 1
    %s465 = scalar_lea.sflag [#allocation3], 1
    %466 = vsyncpa %s465, 1
    %467 = vsyncpa [#allocation6], 1
    %s468 = scalar_lea.sflag [#allocation6], 1
    %469 = vsyncpa %s468, 1
    %470 = vsyncpa [#allocation4], 1
    %s471 = scalar_lea.sflag [#allocation4], 1
    %472 = vsyncpa %s471, 1
    %473 = vsyncpa [#allocation9], 1
    %s474 = scalar_lea.sflag [#allocation9], 1
    %475 = vsyncpa %s474, 1

</llo_original>
